<compile_context>
chip_gen: v5e
topology: v5e:2x2
jax: 0.10.0
libtpu: 0.0.40
codegen_flags: <defaults>
</compile_context>

<pallas_src>
import functools

import jax
import jax.numpy as jnp
from jax.experimental import pallas as pl
from jax.experimental.pallas import tpu as pltpu


def _sigmoid(v):
    return 1.0 / (1.0 + jnp.exp(-v))


# ---------------------------------------------------------------------------
# in-kernel gate math (shared by the fused kernel and two-pass pass 1)
# ---------------------------------------------------------------------------
def _gates_from_pooled(pooled, w1t_ref, b1_ref, w2t_ref, b2_ref, dw1c_ref,
                       dw2t_ref, num_tasks, c1):
    """pooled: (bn, C) f32.  Returns [g_shared, g_task0, ...], each (bn, C) f32."""
    b1 = b1_ref[...]                                         # (1, C1)
    b2 = b2_ref[...]                                         # (1, C)
    # shared ("pretrained") path: row-batched GEMMs on the MXU
    y1 = jnp.dot(pooled, w1t_ref[...], preferred_element_type=jnp.float32) + b1
    y1r = jnp.maximum(y1, 0.0)
    y2 = jnp.dot(y1r, w2t_ref[...], preferred_element_type=jnp.float32) + b2
    gates = [_sigmoid(y2)]
    # first-layer LoRA deltas of ALL tasks in one GEMM: (bn, C) @ (C, T*C1)
    d1_all = jnp.dot(pooled, dw1c_ref[...], preferred_element_type=jnp.float32)
    for t in range(num_tasks):
        # NOTE: bias is (intentionally) added twice on the task path, matching the
        # PyTorch MTLoRAConv 'matrix' mode (pretrained already contains conv.bias
        # and the per-task F.conv2d adds conv.bias again). Do not "fix".
        y1_t = jnp.maximum(y1 + d1_all[:, t * c1:(t + 1) * c1] + b1, 0.0)
        y2_t = y2 + jnp.dot(y1_t, dw2t_ref[t],
                            preferred_element_type=jnp.float32) + b2
        gates.append(_sigmoid(y2_t))
    return gates


# ---------------------------------------------------------------------------
# fused single-pass kernel: pool + gate GEMMs + apply, (C, HW) row resident
# ---------------------------------------------------------------------------
def _fused_kernel(x_ref, w1t_ref, b1_ref, w2t_ref, b2_ref, dw1c_ref, dw2t_ref,
                  out_ref, out_tasks_ref, *, inv_hw, num_tasks, c1):
    x = x_ref[...]                                           # (bn, C, HW) native dtype
    pooled = jnp.sum(x.astype(jnp.float32), axis=-1) * inv_hw    # (bn, C) f32
    gates = _gates_from_pooled(pooled, w1t_ref, b1_ref, w2t_ref, b2_ref,
                               dw1c_ref, dw2t_ref, num_tasks, c1)
    # streaming multiply stays in the input dtype (bf16 stays bf16 on v6e/v7x)
    out_ref[...] = x * gates[0].astype(x.dtype)[:, :, None]
    for t in range(num_tasks):
        out_tasks_ref[t] = x * gates[t + 1].astype(x.dtype)[:, :, None]


# ---------------------------------------------------------------------------
# two-pass path, pass 1: spatial-mean reduction over HW tiles + gate GEMMs
# ---------------------------------------------------------------------------
def _pool_gate_kernel(x_ref, w1t_ref, b1_ref, w2t_ref, b2_ref, dw1c_ref,
                      dw2t_ref, gates_ref, pooled_acc, *, inv_hw, num_tasks, c1):
    hw = pl.program_id(1)

    @pl.when(hw == 0)
    def _():
        pooled_acc[...] = jnp.zeros_like(pooled_acc)

    # padded lanes (if any) are zero-filled, so they do not perturb the sum
    pooled_acc[...] += jnp.sum(x_ref[...].astype(jnp.float32), axis=-1)

    @pl.when(hw == pl.num_programs(1) - 1)
    def _():
        pooled = pooled_acc[...] * inv_hw
        gates = _gates_from_pooled(pooled, w1t_ref, b1_ref, w2t_ref, b2_ref,
                                   dw1c_ref, dw2t_ref, num_tasks, c1)
        for s in range(num_tasks + 1):
            gates_ref[:, s, :] = gates[s]                    # lane-dense (bn, C) rows


# ---------------------------------------------------------------------------
# two-pass path, pass 2: purely memory-bound streaming gate application
# ---------------------------------------------------------------------------
def _apply_gate_kernel(x_ref, gates_ref, out_ref, out_tasks_ref, *, num_tasks):
    x = x_ref[...]                                           # (bn, C, thw)
    g = gates_ref[...].astype(x.dtype)                       # (bn, T+1, C)
    out_ref[...] = x * g[:, 0, :, None]
    for t in range(num_tasks):
        out_tasks_ref[t] = x * g[:, t + 1, :, None]


# ---------------------------------------------------------------------------
# sizing helpers
# ---------------------------------------------------------------------------
def _round_up(v, m):
    return ((v + m - 1) // m) * m


def _tile_bytes(shape, itemsize):
    """Approximate VMEM footprint of one (8,128)-padded tile of `shape`."""
    dims = list(shape)
    dims[-1] = _round_up(dims[-1], 128)
    if len(dims) >= 2:
        dims[-2] = _round_up(dims[-2], 8)
    n = 1
    for d in dims:
        n *= d
    return n * itemsize


def _pick_batch_tile(n, per_row_bytes, fixed_bytes, budget):
    """Largest divisor of n, capped at n//2 when n >= 2 (so the 'parallel' batch
    axis always has >= 2 blocks for the two v7x TensorCores), whose block fits
    the VMEM budget.  Returns 0 if even a single row does not fit."""
    cap = n // 2 if n >= 2 else 1
    for d in range(cap, 0, -1):
        if n % d == 0 and fixed_bytes + d * per_row_bytes <= budget:
            return d
    return 0


def _const_spec(arr, grid_rank):
    nd = arr.ndim
    if grid_rank == 1:
        index_map = lambda nb, _nd=nd: (0,) * _nd
    else:
        index_map = lambda nb, hw, _nd=nd: (0,) * _nd
    return pl.BlockSpec(arr.shape, index_map)


def _vmem_limit_bytes():
    """Generation-aware scoped-VMEM limit: ~48 MiB on v7x (64 MiB physical),
    ~96 MiB on v5e/v6e (128 MiB physical)."""
    try:
        cap = int(pltpu.get_tpu_info().vmem_capacity_bytes)
    except Exception:
        cap = 64 * 1024 * 1024                  # conservative default (v7x)
    return max(32 * 1024 * 1024, min(cap * 3 // 4, 96 * 1024 * 1024))


# ---------------------------------------------------------------------------
# wrapper
# ---------------------------------------------------------------------------
def lora_ca_forward(x, params, num_tasks, *, force_two_pass=False):
    """x: (N, C, H, W). Returns (out (N,C,H,W), out_tasks (T,N,C,H,W))."""
    N, C, H, W = x.shape
    HW = H * W
    T = int(num_tasks)
    assert T >= 1
    C1 = params["w1"].shape[0]
    dtype = x.dtype
    itemsize = jnp.dtype(dtype).itemsize

    # ---- batch-invariant parameter prep (runs once in XLA; B@A hoisted) ----
    w1t = jnp.transpose(params["w1"]).astype(jnp.float32)             # (C, C1)
    w2t = jnp.transpose(params["w2"]).astype(jnp.float32)             # (C1, C)
    b1r = params["b1"].reshape(1, C1).astype(jnp.float32)
    b2r = params["b2"].reshape(1, C).astype(jnp.float32)
    # first-layer per-task deltas concatenated for one batched GEMM: (C, T*C1)
    dw1c = jnp.einsum("tor,trc->cto", params["b1l"], params["a1"]
                      ).reshape(C, T * C1).astype(jnp.float32)
    # second-layer per-task deltas, pre-transposed: (T, C1, C)
    dw2t = jnp.einsum("tor,trc->tco", params["b2l"], params["a2"]).astype(jnp.float32)
    consts = (w1t, b1r, w2t, b2r, dw1c, dw2t)

    vmem_limit = _vmem_limit_bytes()
    budget = vmem_limit - 4 * 1024 * 1024          # headroom for compiler scratch
    # constant operands are double-buffered by the pipeline -> count them twice
    const_bytes = 2 * sum(_tile_bytes(c.shape, 4) for c in consts)

    xr = x.reshape(N, C, HW)

    # ------------------ fused single-pass path ------------------
    # x block + (T+1) output blocks (double-buffered) + f32 pooling temp
    per_row_fused = (2 * (T + 2) * _tile_bytes((C, HW), itemsize)
                     + _tile_bytes((C, HW), 4))
    bn = _pick_batch_tile(N, per_row_fused, const_bytes, budget)

    if bn and not force_two_pass:
        out, out_tasks = pl.pallas_call(
            functools.partial(_fused_kernel, inv_hw=1.0 / HW, num_tasks=T, c1=C1),
            out_shape=(jax.ShapeDtypeStruct((N, C, HW), dtype),
                       jax.ShapeDtypeStruct((T, N, C, HW), dtype)),
            grid_spec=pltpu.PrefetchScalarGridSpec(
                num_scalar_prefetch=0,
                grid=(N // bn,),
                in_specs=[pl.BlockSpec((bn, C, HW), lambda nb: (nb, 0, 0))]
                + [_const_spec(c, 1) for c in consts],
                out_specs=[pl.BlockSpec((bn, C, HW), lambda nb: (nb, 0, 0)),
                           pl.BlockSpec((T, bn, C, HW), lambda nb: (0, nb, 0, 0))],
            ),
            compiler_params=pltpu.CompilerParams(
                dimension_semantics=("parallel",),
                vmem_limit_bytes=vmem_limit),
        )(xr, *consts)
        return out.reshape(N, C, H, W), out_tasks.reshape(T, N, C, H, W)

    # ------------------ two-pass path (HW too large to keep resident) ------------------
    # HW tiles must be multiples of 128; pad only when HW is not one (outputs then
    # need an unpad slice -- rare fallback for big, non-aligned feature maps).
    padded = (HW % 128 != 0)
    HWw = _round_up(HW, 128) if padded else HW
    if padded:
        xr = jnp.pad(xr, ((0, 0), (0, 0), (0, HWw - HW)))

    # largest multiple-of-128 divisor of HWw whose blocks fit at bn=1
    thw = 128
    for cand in sorted((d for d in range(128, HWw + 1, 128) if HWw % d == 0),
                       reverse=True):
        p2 = (2 * (T + 2) * _tile_bytes((C, cand), itemsize)
              + 2 * _tile_bytes((T + 1, C), 4))
        p1 = (2 * _tile_bytes((C, cand), itemsize) + _tile_bytes((C, cand), 4)
              + 2 * _tile_bytes((T + 1, C), 4) + _tile_bytes((8, C), 4))
        if p2 <= budget and const_bytes + p1 <= budget:
            thw = cand
            break

    per_row_p1 = (2 * _tile_bytes((C, thw), itemsize) + _tile_bytes((C, thw), 4)
                  + 2 * _tile_bytes((T + 1, C), 4) + _tile_bytes((8, C), 4))
    per_row_p2 = (2 * (T + 2) * _tile_bytes((C, thw), itemsize)
                  + 2 * _tile_bytes((T + 1, C), 4))
    bn1 = _pick_batch_tile(N, per_row_p1, const_bytes, budget) or 1
    bn2 = _pick_batch_tile(N, per_row_p2, 0, budget) or 1

    # pass 1: pooling reduction over HW tiles + all gate GEMMs (lane-dense output)
    gates = pl.pallas_call(
        functools.partial(_pool_gate_kernel, inv_hw=1.0 / HW, num_tasks=T, c1=C1),
        out_shape=jax.ShapeDtypeStruct((N, T + 1, C), jnp.float32),
        grid_spec=pltpu.PrefetchScalarGridSpec(
            num_scalar_prefetch=0,
            grid=(N // bn1, HWw // thw),
            in_specs=[pl.BlockSpec((bn1, C, thw), lambda nb, hw: (nb, 0, hw))]
            + [_const_spec(c, 2) for c in consts],
            out_specs=pl.BlockSpec((bn1, T + 1, C), lambda nb, hw: (nb, 0, 0)),
            scratch_shapes=[pltpu.VMEM((bn1, C), jnp.float32)],
        ),
        compiler_params=pltpu.CompilerParams(
            dimension_semantics=("parallel", "arbitrary"),
            vmem_limit_bytes=vmem_limit),
    )(xr, *consts)

    # pass 2: streaming out = x * gate, outputs emitted directly in final layouts
    out, out_tasks = pl.pallas_call(
        functools.partial(_apply_gate_kernel, num_tasks=T),
        out_shape=(jax.ShapeDtypeStruct((N, C, HWw), dtype),
                   jax.ShapeDtypeStruct((T, N, C, HWw), dtype)),
        grid_spec=pltpu.PrefetchScalarGridSpec(
            num_scalar_prefetch=0,
            grid=(N // bn2, HWw // thw),
            in_specs=[pl.BlockSpec((bn2, C, thw), lambda nb, hw: (nb, 0, hw)),
                      pl.BlockSpec((bn2, T + 1, C), lambda nb, hw: (nb, 0, 0))],
            out_specs=[pl.BlockSpec((bn2, C, thw), lambda nb, hw: (nb, 0, hw)),
                       pl.BlockSpec((T, bn2, C, thw), lambda nb, hw: (0, nb, 0, hw))],
        ),
        compiler_params=pltpu.CompilerParams(
            dimension_semantics=("parallel", "parallel"),
            vmem_limit_bytes=vmem_limit),
    )(xr, gates)

    if padded:
        out = out[..., :HW]
        out_tasks = out_tasks[..., :HW]
    return out.reshape(N, C, H, W), out_tasks.reshape(T, N, C, H, W)


if __name__ == "__main__":
    key = jax.random.PRNGKey(0)
    N, C, H, W = 2, 8, 16, 16        # small shapes
    reduction = 2
    C1 = C // reduction              # fc1 output channels
    r = 2                            # LoRA rank
    T = 2                            # tasks, e.g. ("seg", "depth")
    task_scales = jnp.array([0.5, 2.0], jnp.float32)   # lora_task_scale per task

    ks = jax.random.split(key, 9)
    x = jax.random.normal(ks[0], (N, C, H, W), jnp.float32)
    w1 = jax.random.normal(ks[1], (C1, C), jnp.float32) * 0.3    # conv1 1x1 (Cout,Cin)
    b1 = jax.random.normal(ks[2], (C1, 1), jnp.float32) * 0.1
    w2 = jax.random.normal(ks[3], (C, C1), jnp.float32) * 0.3    # conv2 1x1
    b2 = jax.random.normal(ks[4], (C, 1), jnp.float32) * 0.1
    # LoRA params (B is zero-init in torch; nonzero here so the branch is exercised)
    a1 = jax.random.normal(ks[5], (T, r, C), jnp.float32) * 0.2
    b1l = jax.random.normal(ks[6], (T, C1, r), jnp.float32) * 0.2
    a2 = jax.random.normal(ks[7], (T, r, C1), jnp.float32) * 0.2
    b2l = jax.random.normal(ks[8], (T, C, r), jnp.float32) * 0.2
    # fold lora_task_scale into B:  (B@A)*scale == (B*scale)@A
    b1l = b1l * task_scales[:, None, None]
    b2l = b2l * task_scales[:, None, None]
    params = dict(w1=w1, b1=b1, w2=w2, b2=b2, a1=a1, b1l=b1l, a2=a2, b2l=b2l)

    def reference(xin):
        pooled = jnp.mean(xin, axis=(2, 3))
        y1 = pooled @ w1.T + b1[:, 0]
        y2 = jnp.maximum(y1, 0.0) @ w2.T + b2[:, 0]
        out = xin * _sigmoid(y2)[:, :, None, None]
        tasks = []
        for t in range(T):
            dw1 = b1l[t] @ a1[t]
            dw2 = b2l[t] @ a2[t]
            y1_t = jnp.maximum(y1 + pooled @ dw1.T + b1[:, 0], 0.0)
            y2_t = y2 + y1_t @ dw2.T + b2[:, 0]
            tasks.append(_sigmoid(y2_t)[:, :, None, None] * xin)
        return out, jnp.stack(tasks, axis=0)

    fused = jax.jit(lambda xin: lora_ca_forward(xin, params, T))
    twopass = jax.jit(lambda xin: lora_ca_forward(xin, params, T, force_two_pass=True))

    ref_out, ref_tasks = reference(x)

    # 1) fused single-pass path (typical SE/CA shapes: HW fits VMEM)
    out, out_tasks = fused(x)
    jax.block_until_ready((out, out_tasks))
    assert out.shape == (N, C, H, W) and out_tasks.shape == (T, N, C, H, W)
    assert jnp.allclose(out, ref_out, atol=1e-5, rtol=1e-5)
    assert jnp.allclose(out_tasks, ref_tasks, atol=1e-5, rtol=1e-5)

    # 2) tiled two-pass path (what large C*HW shapes fall back to)
    out2, out_tasks2 = twopass(x)
    jax.block_until_ready((out2, out_tasks2))
    assert jnp.allclose(out2, ref_out, atol=1e-5, rtol=1e-5)
    assert jnp.allclose(out_tasks2, ref_tasks, atol=1e-5, rtol=1e-5)

    # 3) non-128-multiple spatial size -> fused full-extent block, no pad copy
    xb = jax.random.normal(jax.random.PRNGKey(1), (N, C, 9, 9), jnp.float32)
    ref_out3, ref_tasks3 = reference(xb)
    out3, out_tasks3 = fused(xb)
    jax.block_until_ready((out3, out_tasks3))
    assert jnp.allclose(out3, ref_out3, atol=1e-5, rtol=1e-5)
    assert jnp.allclose(out_tasks3, ref_tasks3, atol=1e-5, rtol=1e-5)

    # 4) non-128-multiple HW forced through the padded two-pass fallback
    out4, out_tasks4 = twopass(xb)
    jax.block_until_ready((out4, out_tasks4))
    assert jnp.allclose(out4, ref_out3, atol=1e-5, rtol=1e-5)
    assert jnp.allclose(out_tasks4, ref_tasks3, atol=1e-5, rtol=1e-5)

    print("KERNEL_OK")
</pallas_src>

<mosaic_0001>
module attributes {stable_mosaic.version = 11 : i64} {
  func.func @_fused_kernel(%arg0: i32, %arg1: memref<1x8x256xf32, #tpu.memory_space<vmem>>, %arg2: memref<8x4xf32, #tpu.memory_space<vmem>>, %arg3: memref<1x4xf32, #tpu.memory_space<vmem>>, %arg4: memref<4x8xf32, #tpu.memory_space<vmem>>, %arg5: memref<1x8xf32, #tpu.memory_space<vmem>>, %arg6: memref<8x8xf32, #tpu.memory_space<vmem>>, %arg7: memref<2x4x8xf32, #tpu.memory_space<vmem>>, %arg8: memref<1x8x256xf32, #tpu.memory_space<vmem>>, %arg9: memref<2x1x8x256xf32, #tpu.memory_space<vmem>>) attributes {dimension_semantics = [#tpu.dimension_semantics<parallel>], iteration_bounds = array<i64: 2>, scalar_prefetch = 0 : i64, scratch_operands = 0 : i64, tpu.core_type = #tpu.core_type<tc>, window_params = [{transform_indices = @transform_0, window_bounds = array<i64: 1, 8, 256>}, {pipeline_mode = #tpu.pipeline_mode<synchronous>, transform_indices = @transform_1, window_bounds = array<i64: 8, 4>}, {pipeline_mode = #tpu.pipeline_mode<synchronous>, transform_indices = @transform_2, window_bounds = array<i64: 1, 4>}, {pipeline_mode = #tpu.pipeline_mode<synchronous>, transform_indices = @transform_3, window_bounds = array<i64: 4, 8>}, {pipeline_mode = #tpu.pipeline_mode<synchronous>, transform_indices = @transform_4, window_bounds = array<i64: 1, 8>}, {pipeline_mode = #tpu.pipeline_mode<synchronous>, transform_indices = @transform_5, window_bounds = array<i64: 8, 8>}, {pipeline_mode = #tpu.pipeline_mode<synchronous>, transform_indices = @transform_6, window_bounds = array<i64: 2, 4, 8>}, {transform_indices = @transform_7, window_bounds = array<i64: 1, 8, 256>}, {transform_indices = @transform_8, window_bounds = array<i64: 2, 1, 8, 256>}]} {
    %c0 = arith.constant 0 : index
    %c0_0 = arith.constant 0 : index
    %c0_1 = arith.constant 0 : index
    %0 = vector.load %arg1[%c0, %c0_0, %c0_1] : memref<1x8x256xf32, #tpu.memory_space<vmem>>, vector<1x8x256xf32>
    %cst = arith.constant dense<0.000000e+00> : vector<1x8xf32>
    %1 = vector.multi_reduction <add>, %0, %cst [2] : vector<1x8x256xf32> to vector<1x8xf32>
    %cst_2 = arith.constant 3.906250e-03 : f32
    %2 = vector.broadcast %cst_2 : f32 to vector<1x8xf32>
    %3 = arith.mulf %1, %2 : vector<1x8xf32>
    %c0_3 = arith.constant 0 : index
    %c0_4 = arith.constant 0 : index
    %4 = vector.load %arg3[%c0_3, %c0_4] : memref<1x4xf32, #tpu.memory_space<vmem>>, vector<1x4xf32>
    %c0_5 = arith.constant 0 : index
    %c0_6 = arith.constant 0 : index
    %5 = vector.load %arg5[%c0_5, %c0_6] : memref<1x8xf32, #tpu.memory_space<vmem>>, vector<1x8xf32>
    %c0_7 = arith.constant 0 : index
    %c0_8 = arith.constant 0 : index
    %6 = vector.load %arg2[%c0_7, %c0_8] : memref<8x4xf32, #tpu.memory_space<vmem>>, vector<8x4xf32>
    %cst_9 = arith.constant dense<0.000000e+00> : vector<1x4xf32>
    %7 = tpu.matmul %3, %6, %cst_9 {dimension_numbers = #tpu.dot_dimension_numbers<[1], [0], [0], [1], [0, 0, 1, 1], [], []>} : vector<1x8xf32>, vector<8x4xf32>, vector<1x4xf32> -> vector<1x4xf32>
    %8 = arith.addf %7, %4 : vector<1x4xf32>
    %cst_10 = arith.constant 0.000000e+00 : f32
    %9 = vector.broadcast %cst_10 : f32 to vector<1x4xf32>
    %10 = arith.maximumf %8, %9 : vector<1x4xf32>
    %c0_11 = arith.constant 0 : index
    %c0_12 = arith.constant 0 : index
    %11 = vector.load %arg4[%c0_11, %c0_12] : memref<4x8xf32, #tpu.memory_space<vmem>>, vector<4x8xf32>
    %cst_13 = arith.constant dense<0.000000e+00> : vector<1x8xf32>
    %12 = tpu.matmul %10, %11, %cst_13 {dimension_numbers = #tpu.dot_dimension_numbers<[1], [0], [0], [1], [0, 0, 1, 1], [], []>} : vector<1x4xf32>, vector<4x8xf32>, vector<1x8xf32> -> vector<1x8xf32>
    %13 = arith.addf %12, %5 : vector<1x8xf32>
    %cst_14 = arith.constant 0.000000e+00 : f32
    %14 = vector.broadcast %cst_14 : f32 to vector<1x8xf32>
    %15 = arith.subf %14, %13 : vector<1x8xf32>
    %16 = math.exp %15 : vector<1x8xf32>
    %cst_15 = arith.constant 1.000000e+00 : f32
    %17 = vector.broadcast %cst_15 : f32 to vector<1x8xf32>
    %18 = arith.addf %17, %16 : vector<1x8xf32>
    %cst_16 = arith.constant 1.000000e+00 : f32
    %19 = vector.broadcast %cst_16 : f32 to vector<1x8xf32>
    %20 = arith.divf %19, %18 : vector<1x8xf32>
    %c0_17 = arith.constant 0 : index
    %c0_18 = arith.constant 0 : index
    %21 = vector.load %arg6[%c0_17, %c0_18] : memref<8x8xf32, #tpu.memory_space<vmem>>, vector<8x8xf32>
    %cst_19 = arith.constant dense<0.000000e+00> : vector<1x8xf32>
    %22 = tpu.matmul %3, %21, %cst_19 {dimension_numbers = #tpu.dot_dimension_numbers<[1], [0], [0], [1], [0, 0, 1, 1], [], []>} : vector<1x8xf32>, vector<8x8xf32>, vector<1x8xf32> -> vector<1x8xf32>
    %23 = vector.extract_strided_slice %22 {offsets = [0, 0], sizes = [1, 4], strides = [1, 1]} : vector<1x8xf32> to vector<1x4xf32>
    %24 = arith.addf %8, %23 : vector<1x4xf32>
    %25 = arith.addf %24, %4 : vector<1x4xf32>
    %cst_20 = arith.constant 0.000000e+00 : f32
    %26 = vector.broadcast %cst_20 : f32 to vector<1x4xf32>
    %27 = arith.maximumf %25, %26 : vector<1x4xf32>
    %c0_21 = arith.constant 0 : index
    %c0_22 = arith.constant 0 : index
    %c0_23 = arith.constant 0 : index
    %28 = vector.load %arg7[%c0_21, %c0_22, %c0_23] : memref<2x4x8xf32, #tpu.memory_space<vmem>>, vector<1x4x8xf32>
    %29 = vector.shape_cast %28 : vector<1x4x8xf32> to vector<4x8xf32>
    %cst_24 = arith.constant dense<0.000000e+00> : vector<1x8xf32>
    %30 = tpu.matmul %27, %29, %cst_24 {dimension_numbers = #tpu.dot_dimension_numbers<[1], [0], [0], [1], [0, 0, 1, 1], [], []>} : vector<1x4xf32>, vector<4x8xf32>, vector<1x8xf32> -> vector<1x8xf32>
    %31 = arith.addf %13, %30 : vector<1x8xf32>
    %32 = arith.addf %31, %5 : vector<1x8xf32>
    %cst_25 = arith.constant 0.000000e+00 : f32
    %33 = vector.broadcast %cst_25 : f32 to vector<1x8xf32>
    %34 = arith.subf %33, %32 : vector<1x8xf32>
    %35 = math.exp %34 : vector<1x8xf32>
    %cst_26 = arith.constant 1.000000e+00 : f32
    %36 = vector.broadcast %cst_26 : f32 to vector<1x8xf32>
    %37 = arith.addf %36, %35 : vector<1x8xf32>
    %cst_27 = arith.constant 1.000000e+00 : f32
    %38 = vector.broadcast %cst_27 : f32 to vector<1x8xf32>
    %39 = arith.divf %38, %37 : vector<1x8xf32>
    %40 = vector.extract_strided_slice %22 {offsets = [0, 4], sizes = [1, 4], strides = [1, 1]} : vector<1x8xf32> to vector<1x4xf32>
    %41 = arith.addf %8, %40 : vector<1x4xf32>
    %42 = arith.addf %41, %4 : vector<1x4xf32>
    %cst_28 = arith.constant 0.000000e+00 : f32
    %43 = vector.broadcast %cst_28 : f32 to vector<1x4xf32>
    %44 = arith.maximumf %42, %43 : vector<1x4xf32>
    %c1 = arith.constant 1 : index
    %c0_29 = arith.constant 0 : index
    %c0_30 = arith.constant 0 : index
    %45 = vector.load %arg7[%c1, %c0_29, %c0_30] : memref<2x4x8xf32, #tpu.memory_space<vmem>>, vector<1x4x8xf32>
    %46 = vector.shape_cast %45 : vector<1x4x8xf32> to vector<4x8xf32>
    %cst_31 = arith.constant dense<0.000000e+00> : vector<1x8xf32>
    %47 = tpu.matmul %44, %46, %cst_31 {dimension_numbers = #tpu.dot_dimension_numbers<[1], [0], [0], [1], [0, 0, 1, 1], [], []>} : vector<1x4xf32>, vector<4x8xf32>, vector<1x8xf32> -> vector<1x8xf32>
    %48 = arith.addf %13, %47 : vector<1x8xf32>
    %49 = arith.addf %48, %5 : vector<1x8xf32>
    %cst_32 = arith.constant 0.000000e+00 : f32
    %50 = vector.broadcast %cst_32 : f32 to vector<1x8xf32>
    %51 = arith.subf %50, %49 : vector<1x8xf32>
    %52 = math.exp %51 : vector<1x8xf32>
    %cst_33 = arith.constant 1.000000e+00 : f32
    %53 = vector.broadcast %cst_33 : f32 to vector<1x8xf32>
    %54 = arith.addf %53, %52 : vector<1x8xf32>
    %cst_34 = arith.constant 1.000000e+00 : f32
    %55 = vector.broadcast %cst_34 : f32 to vector<1x8xf32>
    %56 = arith.divf %55, %54 : vector<1x8xf32>
    %57 = vector.shape_cast %20 : vector<1x8xf32> to vector<1x8x1xf32>
    %58 = vector.broadcast %57 : vector<1x8x1xf32> to vector<1x8x256xf32>
    %59 = arith.mulf %0, %58 : vector<1x8x256xf32>
    %c0_35 = arith.constant 0 : index
    %c0_36 = arith.constant 0 : index
    %c0_37 = arith.constant 0 : index
    %60 = vector.load %arg8[%c0_35, %c0_36, %c0_37] : memref<1x8x256xf32, #tpu.memory_space<vmem>>, vector<1x8x256xf32>
    tpu.vector_store %arg8[%c0_35, %c0_36, %c0_37], %59 {strides = array<i32>} : memref<1x8x256xf32, #tpu.memory_space<vmem>>, vector<1x8x256xf32>,
    %61 = vector.shape_cast %39 : vector<1x8xf32> to vector<1x8x1xf32>
    %62 = vector.broadcast %61 : vector<1x8x1xf32> to vector<1x8x256xf32>
    %63 = arith.mulf %0, %62 : vector<1x8x256xf32>
    %c0_38 = arith.constant 0 : index
    %c0_39 = arith.constant 0 : index
    %c0_40 = arith.constant 0 : index
    %c0_41 = arith.constant 0 : index
    %64 = vector.load %arg9[%c0_38, %c0_39, %c0_40, %c0_41] : memref<2x1x8x256xf32, #tpu.memory_space<vmem>>, vector<1x1x8x256xf32>
    %65 = vector.shape_cast %64 : vector<1x1x8x256xf32> to vector<1x8x256xf32>
    %66 = vector.shape_cast %63 : vector<1x8x256xf32> to vector<1x1x8x256xf32>
    tpu.vector_store %arg9[%c0_38, %c0_39, %c0_40, %c0_41], %66 {strides = array<i32>} : memref<2x1x8x256xf32, #tpu.memory_space<vmem>>, vector<1x1x8x256xf32>,
    %67 = vector.shape_cast %56 : vector<1x8xf32> to vector<1x8x1xf32>
    %68 = vector.broadcast %67 : vector<1x8x1xf32> to vector<1x8x256xf32>
    %69 = arith.mulf %0, %68 : vector<1x8x256xf32>
    %c1_42 = arith.constant 1 : index
    %c0_43 = arith.constant 0 : index
    %c0_44 = arith.constant 0 : index
    %c0_45 = arith.constant 0 : index
    %70 = vector.load %arg9[%c1_42, %c0_43, %c0_44, %c0_45] : memref<2x1x8x256xf32, #tpu.memory_space<vmem>>, vector<1x1x8x256xf32>
    %71 = vector.shape_cast %70 : vector<1x1x8x256xf32> to vector<1x8x256xf32>
    %72 = vector.shape_cast %69 : vector<1x8x256xf32> to vector<1x1x8x256xf32>
    tpu.vector_store %arg9[%c1_42, %c0_43, %c0_44, %c0_45], %72 {strides = array<i32>} : memref<2x1x8x256xf32, #tpu.memory_space<vmem>>, vector<1x1x8x256xf32>,
    return
  }
  func.func @transform_0(%arg0: i32) -> (i32, i32, i32) {
    %c0_i32 = arith.constant 0 : i32
    %c0_i32_0 = arith.constant 0 : i32
    %c0_i32_1 = arith.constant 0 : i32
    return %arg0, %c0_i32, %c0_i32_0 : i32, i32, i32
  }
  func.func @transform_1(%arg0: i32) -> (i32, i32) {
    %c0_i32 = arith.constant 0 : i32
    %c0_i32_0 = arith.constant 0 : i32
    %c0_i32_1 = arith.constant 0 : i32
    return %c0_i32, %c0_i32_0 : i32, i32
  }
  func.func @transform_2(%arg0: i32) -> (i32, i32) {
    %c0_i32 = arith.constant 0 : i32
    %c0_i32_0 = arith.constant 0 : i32
    %c0_i32_1 = arith.constant 0 : i32
    return %c0_i32, %c0_i32_0 : i32, i32
  }
  func.func @transform_3(%arg0: i32) -> (i32, i32) {
    %c0_i32 = arith.constant 0 : i32
    %c0_i32_0 = arith.constant 0 : i32
    %c0_i32_1 = arith.constant 0 : i32
    return %c0_i32, %c0_i32_0 : i32, i32
  }
  func.func @transform_4(%arg0: i32) -> (i32, i32) {
    %c0_i32 = arith.constant 0 : i32
    %c0_i32_0 = arith.constant 0 : i32
    %c0_i32_1 = arith.constant 0 : i32
    return %c0_i32, %c0_i32_0 : i32, i32
  }
  func.func @transform_5(%arg0: i32) -> (i32, i32) {
    %c0_i32 = arith.constant 0 : i32
    %c0_i32_0 = arith.constant 0 : i32
    %c0_i32_1 = arith.constant 0 : i32
    return %c0_i32, %c0_i32_0 : i32, i32
  }
  func.func @transform_6(%arg0: i32) -> (i32, i32, i32) {
    %c0_i32 = arith.constant 0 : i32
    %c0_i32_0 = arith.constant 0 : i32
    %c0_i32_1 = arith.constant 0 : i32
    %c0_i32_2 = arith.constant 0 : i32
    return %c0_i32, %c0_i32_0, %c0_i32_1 : i32, i32, i32
  }
  func.func @transform_7(%arg0: i32) -> (i32, i32, i32) {
    %c0_i32 = arith.constant 0 : i32
    %c0_i32_0 = arith.constant 0 : i32
    %c0_i32_1 = arith.constant 0 : i32
    return %arg0, %c0_i32, %c0_i32_0 : i32, i32, i32
  }
  func.func @transform_8(%arg0: i32) -> (i32, i32, i32, i32) {
    %c0_i32 = arith.constant 0 : i32
    %c0_i32_0 = arith.constant 0 : i32
    %c0_i32_1 = arith.constant 0 : i32
    %c0_i32_2 = arith.constant 0 : i32
    return %c0_i32, %arg0, %c0_i32_0, %c0_i32_1 : i32, i32, i32, i32
  }
}

</mosaic_0001>

<llo_original>
// kernel: _lambda_.1
$region0: #{_lambda_.1}
  #allocation0 [shape = 'u32[]', space=smem, size = 0x4, offset = 0x4, fixed_abs, tag = 'smem constant byte address 0x4 - core index']
  #allocation1 [shape = 'u32[72,128]{1,0:T(1,128)}', space=vmem, size = 0x9000, scoped, tag = 'internal scratch']
  %s0 = inlined_call_operand.vmem [shape: f32[2,8,256], index: 0, kind: input, shape index: {}]
  %s1 = inlined_call_operand.vmem [shape: f32[8,4], index: 1, kind: input, shape index: {}]
  %s2 = inlined_call_operand.vmem [shape: f32[1,4], index: 2, kind: input, shape index: {}]
  %s3 = inlined_call_operand.vmem [shape: f32[4,8], index: 3, kind: input, shape index: {}]
  %s4 = inlined_call_operand.vmem [shape: f32[1,8], index: 4, kind: input, shape index: {}]
  %s5 = inlined_call_operand.vmem [shape: f32[8,8], index: 5, kind: input, shape index: {}]
  %s6 = inlined_call_operand.vmem [shape: f32[2,4,8], index: 6, kind: input, shape index: {}]
  %s7 = inlined_call_operand.vmem [shape: f32[2,8,256], index: 7, kind: output, shape index: {0}]
  %s8 = inlined_call_operand.vmem [shape: f32[2,2,8,256], index: 8, kind: output, shape index: {1}]
  %9 = xla_tuple %s7, %s8
  %s10 = sld [smem:[#allocation0]]
  $region88: #{_lambda_.1} parent=0
    _
  %s12 = ssub.s32 1, %s10
  %s13 = scalar_select 0, %s12, %s10
  $region1: #{_lambda_.1} parent=0
    #allocation2 [shape = 'u8[32768]{0}', space=vmem, size = 0x8000, scoped, tag = 'output window, operand 1']
    loop: start=0, step=1, limit=4
    $region2: #{_lambda_.1} parent=1 // loop_pre_header
      _
    $region3: #{_lambda_.1} parent=1 // loop_header
      %s15 = sphi 0, %s19
      %p16 = scmp.ge.s32.totalorder %s15, 4
      %s25 = sphi 0, %s27
      %s28 = sphi 0, %s25
      %s29 = sphi 0, %s28
      %s45 = sphi 0, %s29
      %s49 = sphi 0, %s49
      %s51 = sphi 0, %s49
      %s52 = sphi 0, %s51
      %s66 = sphi 0, %s52
      %s70 = sphi 0, %s70
      %s72 = sphi 0, %s70
      %s73 = sphi 0, %s72
      %s87 = sphi 0, %s73
      %s91 = sphi 0, %s91
      %s93 = sphi 0, %s91
      %s94 = sphi 0, %s93
      %s108 = sphi 0, %s94
      %s112 = sphi 0, %s112
      %s114 = sphi 0, %s112
      %s115 = sphi 0, %s114
      %s129 = sphi 0, %s115
      %s133 = sphi 0, %s133
      %s135 = sphi 0, %s133
      %s136 = sphi 0, %s135
      %s150 = sphi 0, %s136
      %s154 = sphi 0, %s154
      %s156 = sphi 0, %s154
      %s157 = sphi 0, %s156
      %s171 = sphi 0, %s157
      %s177 = sphi 0, %s179
      %s180 = sphi 0, %s177
      %s181 = sphi 0, %s180
      %s197 = sphi 0, %s181
      %s203 = sphi 0, %s205
      %s206 = sphi 0, %s203
      %s207 = sphi 0, %s206
      %s223 = sphi 0, %s207
    $region4: #{_lambda_.1} parent=1 // loop_header_branch
      %18 = sbr.rel (%p16) target = $region8
    $region5: #{_lambda_.1} parent=1 // loop_body
      %s20 = ssub.s32 %s15, 1
      %s21 = ssub.s32 %s15, 2
      %s22 = sadd.s32 %s15, 1
      %s23 = ssub.s32 %s15, %s22
      %p24 = scmp.eq.s32.totalorder %s23, 0
      %s26 = sadd.s32 %s25, 1
      %s27 = scalar_select %p24, %s25, %s26
      %p30 = pneg %p24
      %p31 = scmp.eq.s32.totalorder %s15, 1
      %p32 = por %p30, %p31
      %p33 = scmp.ne.s32.totalorder %s25, %s28
      %p34 = scmp.eq.s32.totalorder %s15, 0
      %p35 = por %p33, %p34
      %p36 = scmp.ne.s32.totalorder %s25, %s28
      %p37 = scmp.eq.s32.totalorder %s20, 1
      %p38 = por %p36, %p37
      %p39 = scmp.ne.s32.totalorder %s28, %s29
      %p40 = scmp.eq.s32.totalorder %s20, 0
      %p41 = por %p39, %p40
      %p42 = scmp.ne.s32.totalorder %s28, %s29
      %p43 = scmp.eq.s32.totalorder %s21, 1
      %p44 = por %p42, %p43
      %p46 = scmp.ne.s32.totalorder %s29, %s45
      %p47 = scmp.eq.s32.totalorder %s21, 0
      %p48 = por %p46, %p47
      %s50 = sadd.s32 %s49, 1
      %p53 = scmp.eq.s32.totalorder %s15, 1
      %p54 = scmp.ne.s32.totalorder %s49, %s51
      %p55 = scmp.eq.s32.totalorder %s15, 0
      %p56 = por %p54, %p55
      %p57 = scmp.ne.s32.totalorder %s49, %s51
      %p58 = scmp.eq.s32.totalorder %s20, 1
      %p59 = por %p57, %p58
      %p60 = scmp.ne.s32.totalorder %s51, %s52
      %p61 = scmp.eq.s32.totalorder %s20, 0
      %p62 = por %p60, %p61
      %p63 = scmp.ne.s32.totalorder %s51, %s52
      %p64 = scmp.eq.s32.totalorder %s21, 1
      %p65 = por %p63, %p64
      %p67 = scmp.ne.s32.totalorder %s52, %s66
      %p68 = scmp.eq.s32.totalorder %s21, 0
      %p69 = por %p67, %p68
      %s71 = sadd.s32 %s70, 1
      %p74 = scmp.eq.s32.totalorder %s15, 1
      %p75 = scmp.ne.s32.totalorder %s70, %s72
      %p76 = scmp.eq.s32.totalorder %s15, 0
      %p77 = por %p75, %p76
      %p78 = scmp.ne.s32.totalorder %s70, %s72
      %p79 = scmp.eq.s32.totalorder %s20, 1
      %p80 = por %p78, %p79
      %p81 = scmp.ne.s32.totalorder %s72, %s73
      %p82 = scmp.eq.s32.totalorder %s20, 0
      %p83 = por %p81, %p82
      %p84 = scmp.ne.s32.totalorder %s72, %s73
      %p85 = scmp.eq.s32.totalorder %s21, 1
      %p86 = por %p84, %p85
      %p88 = scmp.ne.s32.totalorder %s73, %s87
      %p89 = scmp.eq.s32.totalorder %s21, 0
      %p90 = por %p88, %p89
      %s92 = sadd.s32 %s91, 1
      %p95 = scmp.eq.s32.totalorder %s15, 1
      %p96 = scmp.ne.s32.totalorder %s91, %s93
      %p97 = scmp.eq.s32.totalorder %s15, 0
      %p98 = por %p96, %p97
      %p99 = scmp.ne.s32.totalorder %s91, %s93
      %p100 = scmp.eq.s32.totalorder %s20, 1
      %p101 = por %p99, %p100
      %p102 = scmp.ne.s32.totalorder %s93, %s94
      %p103 = scmp.eq.s32.totalorder %s20, 0
      %p104 = por %p102, %p103
      %p105 = scmp.ne.s32.totalorder %s93, %s94
      %p106 = scmp.eq.s32.totalorder %s21, 1
      %p107 = por %p105, %p106
      %p109 = scmp.ne.s32.totalorder %s94, %s108
      %p110 = scmp.eq.s32.totalorder %s21, 0
      %p111 = por %p109, %p110
      %s113 = sadd.s32 %s112, 1
      %p116 = scmp.eq.s32.totalorder %s15, 1
      %p117 = scmp.ne.s32.totalorder %s112, %s114
      %p118 = scmp.eq.s32.totalorder %s15, 0
      %p119 = por %p117, %p118
      %p120 = scmp.ne.s32.totalorder %s112, %s114
      %p121 = scmp.eq.s32.totalorder %s20, 1
      %p122 = por %p120, %p121
      %p123 = scmp.ne.s32.totalorder %s114, %s115
      %p124 = scmp.eq.s32.totalorder %s20, 0
      %p125 = por %p123, %p124
      %p126 = scmp.ne.s32.totalorder %s114, %s115
      %p127 = scmp.eq.s32.totalorder %s21, 1
      %p128 = por %p126, %p127
      %p130 = scmp.ne.s32.totalorder %s115, %s129
      %p131 = scmp.eq.s32.totalorder %s21, 0
      %p132 = por %p130, %p131
      %s134 = sadd.s32 %s133, 1
      %p137 = scmp.eq.s32.totalorder %s15, 1
      %p138 = scmp.ne.s32.totalorder %s133, %s135
      %p139 = scmp.eq.s32.totalorder %s15, 0
      %p140 = por %p138, %p139
      %p141 = scmp.ne.s32.totalorder %s133, %s135
      %p142 = scmp.eq.s32.totalorder %s20, 1
      %p143 = por %p141, %p142
      %p144 = scmp.ne.s32.totalorder %s135, %s136
      %p145 = scmp.eq.s32.totalorder %s20, 0
      %p146 = por %p144, %p145
      %p147 = scmp.ne.s32.totalorder %s135, %s136
      %p148 = scmp.eq.s32.totalorder %s21, 1
      %p149 = por %p147, %p148
      %p151 = scmp.ne.s32.totalorder %s136, %s150
      %p152 = scmp.eq.s32.totalorder %s21, 0
      %p153 = por %p151, %p152
      %s155 = sadd.s32 %s154, 1
      %p158 = scmp.eq.s32.totalorder %s15, 1
      %p159 = scmp.ne.s32.totalorder %s154, %s156
      %p160 = scmp.eq.s32.totalorder %s15, 0
      %p161 = por %p159, %p160
      %p162 = scmp.ne.s32.totalorder %s154, %s156
      %p163 = scmp.eq.s32.totalorder %s20, 1
      %p164 = por %p162, %p163
      %p165 = scmp.ne.s32.totalorder %s156, %s157
      %p166 = scmp.eq.s32.totalorder %s20, 0
      %p167 = por %p165, %p166
      %p168 = scmp.ne.s32.totalorder %s156, %s157
      %p169 = scmp.eq.s32.totalorder %s21, 1
      %p170 = por %p168, %p169
      %p172 = scmp.ne.s32.totalorder %s157, %s171
      %p173 = scmp.eq.s32.totalorder %s21, 0
      %p174 = por %p172, %p173
      %s175 = ssub.s32 %s15, %s22
      %p176 = scmp.eq.s32.totalorder %s175, 0
      %s178 = sadd.s32 %s177, 1
      %s179 = scalar_select %p176, %s177, %s178
      %p182 = pneg %p176
      %p183 = scmp.eq.s32.totalorder %s15, 1
      %p184 = por %p182, %p183
      %p185 = scmp.ne.s32.totalorder %s177, %s180
      %p186 = scmp.eq.s32.totalorder %s15, 0
      %p187 = por %p185, %p186
      %p188 = scmp.ne.s32.totalorder %s177, %s180
      %p189 = scmp.eq.s32.totalorder %s20, 1
      %p190 = por %p188, %p189
      %p191 = scmp.ne.s32.totalorder %s180, %s181
      %p192 = scmp.eq.s32.totalorder %s20, 0
      %p193 = por %p191, %p192
      %p194 = scmp.ne.s32.totalorder %s180, %s181
      %p195 = scmp.eq.s32.totalorder %s21, 1
      %p196 = por %p194, %p195
      %p198 = scmp.ne.s32.totalorder %s181, %s197
      %p199 = scmp.eq.s32.totalorder %s21, 0
      %p200 = por %p198, %p199
      %s201 = ssub.s32 %s15, %s22
      %p202 = scmp.eq.s32.totalorder %s201, 0
      %s204 = sadd.s32 %s203, 1
      %s205 = scalar_select %p202, %s203, %s204
      %p208 = pneg %p202
      %p209 = scmp.eq.s32.totalorder %s15, 1
      %p210 = por %p208, %p209
      %p211 = scmp.ne.s32.totalorder %s203, %s206
      %p212 = scmp.eq.s32.totalorder %s15, 0
      %p213 = por %p211, %p212
      %p214 = scmp.ne.s32.totalorder %s203, %s206
      %p215 = scmp.eq.s32.totalorder %s20, 1
      %p216 = por %p214, %p215
      %p217 = scmp.ne.s32.totalorder %s206, %s207
      %p218 = scmp.eq.s32.totalorder %s20, 0
      %p219 = por %p217, %p218
      %p220 = scmp.ne.s32.totalorder %s206, %s207
      %p221 = scmp.eq.s32.totalorder %s21, 1
      %p222 = por %p220, %p221
      %p224 = scmp.ne.s32.totalorder %s207, %s223
      %p225 = scmp.eq.s32.totalorder %s21, 0
      %p226 = por %p224, %p225
      %p227 = scmp.le.s32.totalorder 1, %s15
      %p228 = scmp.lt.s32.totalorder %s15, 3
      %p229 = pnand %p227, %p228
      %p230 = pneg %p229
      // Predicated region
      $region9: #{_lambda_.1} parent=5 // pred_check
        _
      $region10: #{_lambda_.1} parent=5 // pred_check_branch
        %232 = sbr.rel (%p229) target = $region12
      $region11: #{_lambda_.1} parent=5 // pred_region
        %s233 = ssub.s32 %s15, 1
        // Predicated region
        $region13: #{_lambda_.1} parent=11 // pred_check
          %p234 = pneg %p62
        $region14: #{_lambda_.1} parent=11 // pred_check_branch
          %236 = sbr.rel (%p234) target = $region16
        $region15: #{_lambda_.1} parent=11 // pred_region
          _
        $region16: #{_lambda_.1} parent=11 // pred_fallthru
          _
        // Predicated region
        $region17: #{_lambda_.1} parent=11 // pred_check
          %p237 = pneg %p83
        $region18: #{_lambda_.1} parent=11 // pred_check_branch
          %239 = sbr.rel (%p237) target = $region20
        $region19: #{_lambda_.1} parent=11 // pred_region
          _
        $region20: #{_lambda_.1} parent=11 // pred_fallthru
          _
        // Predicated region
        $region21: #{_lambda_.1} parent=11 // pred_check
          %p240 = pneg %p104
        $region22: #{_lambda_.1} parent=11 // pred_check_branch
          %242 = sbr.rel (%p240) target = $region24
        $region23: #{_lambda_.1} parent=11 // pred_region
          _
        $region24: #{_lambda_.1} parent=11 // pred_fallthru
          _
        // Predicated region
        $region25: #{_lambda_.1} parent=11 // pred_check
          %p243 = pneg %p125
        $region26: #{_lambda_.1} parent=11 // pred_check_branch
          %245 = sbr.rel (%p243) target = $region28
        $region27: #{_lambda_.1} parent=11 // pred_region
          _
        $region28: #{_lambda_.1} parent=11 // pred_fallthru
          _
        // Predicated region
        $region29: #{_lambda_.1} parent=11 // pred_check
          %p246 = pneg %p146
        $region30: #{_lambda_.1} parent=11 // pred_check_branch
          %248 = sbr.rel (%p246) target = $region32
        $region31: #{_lambda_.1} parent=11 // pred_region
          _
        $region32: #{_lambda_.1} parent=11 // pred_fallthru
          _
        // Predicated region
        $region33: #{_lambda_.1} parent=11 // pred_check
          %p249 = pneg %p167
        $region34: #{_lambda_.1} parent=11 // pred_check_branch
          %251 = sbr.rel (%p249) target = $region36
        $region35: #{_lambda_.1} parent=11 // pred_region
          _
        $region36: #{_lambda_.1} parent=11 // pred_fallthru
          _
      $region12: #{_lambda_.1} parent=5 // pred_fallthru
        _
      %p252 = scmp.lt.s32.totalorder %s15, 2
      // Predicated region
      $region37: #{_lambda_.1} parent=5 // pred_check
        %p253 = pneg %p252
      $region38: #{_lambda_.1} parent=5 // pred_check_branch
        %255 = sbr.rel (%p253) target = $region40
      $region39: #{_lambda_.1} parent=5 // pred_region
        // Predicated region
        $region41: #{_lambda_.1} parent=39 // pred_check
          %p256 = pneg %p35
        $region42: #{_lambda_.1} parent=39 // pred_check_branch
          %258 = sbr.rel (%p256) target = $region44
        $region43: #{_lambda_.1} parent=39 // pred_region
          %p259 = scmp.lt.s32.totalorder %s15, 1
          %s260 = scalar_select %p259, %s15, 1
          %s261 = smul.addr %s260, 2
          %s262 = smul.addr %s261, 8
          %s263 = scalar_lea.vmem %s0, %s262
        $region44: #{_lambda_.1} parent=39 // pred_fallthru
          _
      $region40: #{_lambda_.1} parent=5 // pred_fallthru
        _
      %p264 = scmp.le.s32.totalorder 1, %s15
      %p265 = scmp.lt.s32.totalorder %s15, 3
      %p266 = pnand %p264, %p265
      %p267 = pneg %p266
      // Predicated region
      $region45: #{_lambda_.1} parent=5 // pred_check
        _
      $region46: #{_lambda_.1} parent=5 // pred_check_branch
        %269 = sbr.rel (%p266) target = $region48
      $region47: #{_lambda_.1} parent=5 // pred_region
        %s270 = ssub.s32 %s15, 1
        %p271 = scmp.lt.s32.totalorder %s20, 1
        %s272 = scalar_select %p271, %s20, 1
        %s273 = smul.addr %s272, 2
        %s274 = smul.addr %s273, 8
        %s275 = scalar_lea.vmem %s0, %s274
        %p276 = pneg %p41
        %p277 = pneg %p38
        %p278 = pneg %p62
        %p279 = pneg %p59
        %p280 = pneg %p83
        %p281 = pneg %p80
        %p282 = pneg %p104
        %p283 = pneg %p101
        %p284 = pneg %p125
        %p285 = pneg %p122
        %p286 = pneg %p146
        %p287 = pneg %p143
        %p288 = pneg %p167
        %p289 = pneg %p164
        %p290 = pneg %p193
        %p291 = pneg %p190
        %p292 = scmp.lt.s32.totalorder %s20, 1
        %s293 = scalar_select %p292, %s20, 1
        %s294 = smul.addr %s293, 2
        %s295 = smul.addr %s294, 8
        %s296 = scalar_lea.vmem %s7, %s295
        %p297 = pneg %p219
        %p298 = pneg %p216
        %s299 = sand.u32 %s206, 1
        %s300 = sand.u32 %s206, 1
        %s301 = smul.addr %s300, 32
        %s302 = scalar_lea.vmem [#allocation2], %s301
        %p303 = scmp.lt.s32.totalorder %s20, 1
        %s304 = scalar_select %p303, %s20, 1
        %s305 = smul.addr %s304, 2
        %s306 = smul.addr %s305, 8
        %s307 = scalar_lea.vmem %s0, %s306
        %p308 = scmp.lt.s32.totalorder %s20, 1
        %s309 = scalar_select %p308, %s20, 1
        %s310 = smul.addr %s309, 2
        %s311 = smul.addr %s310, 8
        %s312 = scalar_lea.vmem %s7, %s311
        %v313 = vld [vmem:[%s307] sm:$0xff]
        %v314 = vld [vmem:[%s307 + $0x8] sm:$0xff]
        %v315 = vadd.f32 %v313, %v314
        %316 = vadd.xlane.f32.xlu0 %v315
        %v317 = vpop.xlane.xlu0 %316
        %v318 = vmul.f32 %v317, 0.00390625
        %v319 = vld [vmem:[%s2] sm:$0x1]
        %v320 = vld [vmem:[%s4] sm:$0x1]
        %v321 = vld [vmem:[%s1] sm:$0xff]
        %v323 = vlaneseq
        %v324 = vand.u32 %v323, 127
        %v325 = vperm.slane %v318, %v324
        %vm326 = vcmask 64512
        %v327 = vsel %vm326, %v325, 0
        %329 = vmatpush.msra.mxu0 0.0
        %330 = vmatpush.msra.mxu0 0.0
        %331 = vmatpush.msra.mxu0 0.0
        %332 = vmatpush.msra.mxu0 0.0
        %333 = vmatpush.msra.mxu0 0.0
        %334 = vmatpush.msra.mxu0 0.0
        %335 = vmatpush.msra.mxu0 0.0
        %336 = vmatpush.msra.mxu0 0.0
        %337 = vmatpush.msra.mxu0 0.0
        %338 = vmatpush.msra.mxu0 0.0
        %339 = vmatpush.msra.mxu0 0.0
        %340 = vmatpush.msra.mxu0 0.0
        %341 = vmatpush.msra.mxu0 0.0
        %342 = vmatpush.msra.mxu0 0.0
        %343 = vmatpush.msra.mxu0 0.0
        %344 = vmatpush.msra.mxu0 %v321
        %345 = vmatmul.f32.gmra.mxu0 %v327
        %v346 = vpop.f32.mrf.mxu0
        %v347 = vadd.f32 %v319, %v346
        %348 = vdwg.mxu0
        %v349 = vmax.f32 %v347, 0.0
        %v350 = vld [vmem:[%s3] sm:$0xf]
        %vm351 = vcmask 31744
        %v353 = vsel %vm351, %v349, 0
        %vm355 = vcmask 1043456
        %v357 = vsel %vm355, %v350, 0
        %359 = vmatpush.msra.mxu0 0.0
        %360 = vmatpush.msra.mxu0 0.0
        %361 = vmatpush.msra.mxu0 0.0
        %362 = vmatpush.msra.mxu0 0.0
        %363 = vmatpush.msra.mxu0 0.0
        %364 = vmatpush.msra.mxu0 0.0
        %365 = vmatpush.msra.mxu0 0.0
        %366 = vmatpush.msra.mxu0 0.0
        %367 = vmatpush.msra.mxu0 0.0
        %368 = vmatpush.msra.mxu0 0.0
        %369 = vmatpush.msra.mxu0 0.0
        %370 = vmatpush.msra.mxu0 0.0
        %371 = vmatpush.msra.mxu0 0.0
        %372 = vmatpush.msra.mxu0 0.0
        %373 = vmatpush.msra.mxu0 0.0
        %374 = vmatpush.msra.mxu0 %v357
        %375 = vmatmul.f32.gmra.mxu0 %v353
        %v376 = vpop.f32.mrf.mxu0
        %v377 = vadd.f32 %v320, %v376
        %378 = vdwg.mxu0
        %v379 = vsub.f32 0.0, %v377
        %v380 = vmul.f32 %v379, 1.442695
        %v381 = vpow.pop %v380
        %v382 = vadd.f32 %v381, 1.0
        %v383 = vrcp.pop %v382
        %v384 = vmul.f32 %v382, %v383
        %v385 = vsub.f32 1.0, %v384
        %v386 = vmul.f32 %v383, %v385
        %v387 = vadd.f32 %v383, %v386
        %vm388 = vweird.f32 %v382
        %vm389 = vweird.f32 %v383
        %vm390 = vmor %vm388, %vm389
        %v391 = vsel %vm390, %v383, %v387
        %v392 = vand.u32 2147483647, %v382
        %vm393 = vcmp.eq.f32.partialorder %v392, 8.507059e+37
        %v394 = vand.u32 %v382, 2147483648
        %v395 = vor.u32 1.1754944e-38, %v394
        %v396 = vsel %vm393, %v395, %v391
        %v397 = vmul.f32 1.0, %v396
        %v398 = vld [vmem:[%s5] sm:$0xff]
        %399 = vmatpush.msra.mxu0 0.0
        %400 = vmatpush.msra.mxu0 0.0
        %401 = vmatpush.msra.mxu0 0.0
        %402 = vmatpush.msra.mxu0 0.0
        %403 = vmatpush.msra.mxu0 0.0
        %404 = vmatpush.msra.mxu0 0.0
        %405 = vmatpush.msra.mxu0 0.0
        %406 = vmatpush.msra.mxu0 0.0
        %407 = vmatpush.msra.mxu0 0.0
        %408 = vmatpush.msra.mxu0 0.0
        %409 = vmatpush.msra.mxu0 0.0
        %410 = vmatpush.msra.mxu0 0.0
        %411 = vmatpush.msra.mxu0 0.0
        %412 = vmatpush.msra.mxu0 0.0
        %413 = vmatpush.msra.mxu0 0.0
        %414 = vmatpush.msra.mxu0 %v398
        %415 = vmatmul.f32.gmra.mxu0 %v327
        %v416 = vpop.f32.mrf.mxu0
        %v417 = vadd.f32 0.0, %v416
        %418 = vdwg.mxu0
        %v419 = vadd.f32 %v347, %v417
        %v420 = vadd.f32 %v419, %v319
        %v421 = vmax.f32 %v420, 0.0
        %v422 = vld [vmem:[%s6] sm:$0xf]
        %v424 = vsel %vm351, %v421, 0
        %v427 = vsel %vm355, %v422, 0
        %429 = vmatpush.msra.mxu0 0.0
        %430 = vmatpush.msra.mxu0 0.0
        %431 = vmatpush.msra.mxu0 0.0
        %432 = vmatpush.msra.mxu0 0.0
        %433 = vmatpush.msra.mxu0 0.0
        %434 = vmatpush.msra.mxu0 0.0
        %435 = vmatpush.msra.mxu0 0.0
        %436 = vmatpush.msra.mxu0 0.0
        %437 = vmatpush.msra.mxu0 0.0
        %438 = vmatpush.msra.mxu0 0.0
        %439 = vmatpush.msra.mxu0 0.0
        %440 = vmatpush.msra.mxu0 0.0
        %441 = vmatpush.msra.mxu0 0.0
        %442 = vmatpush.msra.mxu0 0.0
        %443 = vmatpush.msra.mxu0 0.0
        %444 = vmatpush.msra.mxu0 %v427
        %445 = vmatmul.f32.gmra.mxu0 %v424
        %v446 = vpop.f32.mrf.mxu0
        %v447 = vadd.f32 0.0, %v446
        %448 = vdwg.mxu0
        %v449 = vadd.f32 %v377, %v447
        %v450 = vadd.f32 %v449, %v320
        %v451 = vsub.f32 0.0, %v450
        %v452 = vmul.f32 %v451, 1.442695
        %v453 = vpow.pop %v452
        %v454 = vadd.f32 %v453, 1.0
        %v455 = vrcp.pop %v454
        %v456 = vmul.f32 %v454, %v455
        %v457 = vsub.f32 1.0, %v456
        %v458 = vmul.f32 %v455, %v457
        %v459 = vadd.f32 %v455, %v458
        %vm460 = vweird.f32 %v454
        %vm461 = vweird.f32 %v455
        %vm462 = vmor %vm460, %vm461
        %v463 = vsel %vm462, %v455, %v459
        %v464 = vand.u32 2147483647, %v454
        %vm465 = vcmp.eq.f32.partialorder %v464, 8.507059e+37
        %v466 = vand.u32 %v454, 2147483648
        %v467 = vor.u32 1.1754944e-38, %v466
        %v468 = vsel %vm465, %v467, %v463
        %v469 = vmul.f32 1.0, %v468
        %471 = vrot.lane.b32.xlu0 %v417, 124
        %v472 = vpop.permute.xlu0 %471
        %v474 = vadd.f32 %v347, %v472
        %v475 = vadd.f32 %v474, %v319
        %v476 = vmax.f32 %v475, 0.0
        %s477 = scalar_lea.vmem %s6, 4
        %v478 = vld [vmem:[%s477] sm:$0xf]
        %v480 = vsel %vm351, %v476, 0
        %v483 = vsel %vm355, %v478, 0
        %485 = vmatpush.msra.mxu0 0.0
        %486 = vmatpush.msra.mxu0 0.0
        %487 = vmatpush.msra.mxu0 0.0
        %488 = vmatpush.msra.mxu0 0.0
        %489 = vmatpush.msra.mxu0 0.0
        %490 = vmatpush.msra.mxu0 0.0
        %491 = vmatpush.msra.mxu0 0.0
        %492 = vmatpush.msra.mxu0 0.0
        %493 = vmatpush.msra.mxu0 0.0
        %494 = vmatpush.msra.mxu0 0.0
        %495 = vmatpush.msra.mxu0 0.0
        %496 = vmatpush.msra.mxu0 0.0
        %497 = vmatpush.msra.mxu0 0.0
        %498 = vmatpush.msra.mxu0 0.0
        %499 = vmatpush.msra.mxu0 0.0
        %500 = vmatpush.msra.mxu0 %v483
        %501 = vmatmul.f32.gmra.mxu0 %v480
        %v502 = vpop.f32.mrf.mxu0
        %v503 = vadd.f32 0.0, %v502
        %504 = vdwg.mxu0
        %v505 = vadd.f32 %v377, %v503
        %v506 = vadd.f32 %v505, %v320
        %v507 = vsub.f32 0.0, %v506
        %v508 = vmul.f32 %v507, 1.442695
        %v509 = vpow.pop %v508
        %v510 = vadd.f32 %v509, 1.0
        %v511 = vrcp.pop %v510
        %v512 = vmul.f32 %v510, %v511
        %v513 = vsub.f32 1.0, %v512
        %v514 = vmul.f32 %v511, %v513
        %v515 = vadd.f32 %v511, %v514
        %vm516 = vweird.f32 %v510
        %vm517 = vweird.f32 %v511
        %vm518 = vmor %vm516, %vm517
        %v519 = vsel %vm518, %v511, %v515
        %v520 = vand.u32 2147483647, %v510
        %vm521 = vcmp.eq.f32.partialorder %v520, 8.507059e+37
        %v522 = vand.u32 %v510, 2147483648
        %v523 = vor.u32 1.1754944e-38, %v522
        %v524 = vsel %vm521, %v523, %v519
        %v525 = vmul.f32 1.0, %v524
        %v526 = vperm.slane %v397, 0
        %v527 = vlaneseq
        %v528 = vshrl.u32 %v527, 7
        %530 = vset.pattern.permute.xlu0 %v528
        %531 = vperm.xlu0 %530, %v526
        %v532 = vpop.permute.xlu0 %531
        %v533 = vmul.f32 %v313, %v532
        %v534 = vmul.f32 %v314, %v532
        %535 = vst [vmem:[%s312] sm:$0xff] %v533
        %536 = vst [vmem:[%s312 + $0x8] sm:$0xff] %v534
        %v537 = vperm.slane %v469, 0
        %v538 = vlaneseq
        %v539 = vshrl.u32 %v538, 7
        %541 = vset.pattern.permute.xlu0 %v539
        %542 = vperm.xlu0 %541, %v537
        %v543 = vpop.permute.xlu0 %542
        %v544 = vmul.f32 %v313, %v543
        %v545 = vmul.f32 %v314, %v543
        %546 = vst [vmem:[%s302] sm:$0xff] %v544
        %547 = vst [vmem:[%s302 + $0x8] sm:$0xff] %v545
        %v548 = vperm.slane %v525, 0
        %v549 = vlaneseq
        %v550 = vshrl.u32 %v549, 7
        %552 = vset.pattern.permute.xlu0 %v550
        %553 = vperm.xlu0 %552, %v548
        %v554 = vpop.permute.xlu0 %553
        %v555 = vmul.f32 %v313, %v554
        %v556 = vmul.f32 %v314, %v554
        %s557 = scalar_lea.vmem %s302, 16 [#allocation2]
        %558 = vst [vmem:[%s557] sm:$0xff] %v555
        %559 = vst [vmem:[%s557 + $0x8] sm:$0xff] %v556
        %p560 = scmp.lt.s32.totalorder %s20, 1
        %s561 = scalar_select %p560, %s20, 1
        %s562 = smul.addr %s561, 2
        %s563 = smul.addr %s562, 8
        %s564 = scalar_lea.vmem %s7, %s563
        %s565 = sand.u32 %s206, 1
        %s566 = sand.u32 %s206, 1
        %s567 = smul.addr %s566, 32
        %s568 = scalar_lea.vmem [#allocation2], %s567
        // Predicated region
        $region49: #{_lambda_.1} parent=47 // pred_check
          %p569 = pneg %p190
        $region50: #{_lambda_.1} parent=47 // pred_check_branch
          %571 = sbr.rel (%p569) target = $region52
        $region51: #{_lambda_.1} parent=47 // pred_region
          _
        $region52: #{_lambda_.1} parent=47 // pred_fallthru
          _
        // Predicated region
        $region53: #{_lambda_.1} parent=47 // pred_check
          %p572 = pneg %p216
        $region54: #{_lambda_.1} parent=47 // pred_check_branch
          %574 = sbr.rel (%p572) target = $region56
        $region55: #{_lambda_.1} parent=47 // pred_region
          %s575 = smul.addr %s20, 2
          %s576 = smul.addr %s575, 8
          %s577 = scalar_lea.vmem %s8, %s576
          // Predicated region
          $region57: #{_lambda_.1} parent=55 // pred_check
            _
          $region58: #{_lambda_.1} parent=55 // pred_check_branch
            %579 = sbr.rel (0) target = $region60
          $region59: #{_lambda_.1} parent=55 // pred_region
            // Predicated region
            $region61: #{_lambda_.1} parent=59 // pred_check
              _
            $region62: #{_lambda_.1} parent=59 // pred_check_branch
              %581 = sbr.rel (0) target = $region64
            $region63: #{_lambda_.1} parent=59 // pred_region
              loop: start=0, step=1, limit=1
              $region65: #{_lambda_.1} parent=63 // loop_pre_header
                _
              $region66: #{_lambda_.1} parent=63 // loop_header
                %s583 = sphi 0, %s587
                %p584 = scmp.ge.s32.totalorder %s583, 1
                %s588 = sphi %s568, %s568
                %s589 = sphi %s577, %s577
              $region67: #{_lambda_.1} parent=63 // loop_header_branch
                %586 = sbr.rel (%p584) target = $region71
              $region68: #{_lambda_.1} parent=63 // loop_body
                %v590 = vld [vmem:[%s588] sm:$0xff]
                %591 = vst [vmem:[%s589] sm:$0xff] %v590
                %v592 = vld [vmem:[%s588 + $0x8] sm:$0xff]
                %593 = vst [vmem:[%s589 + $0x8] sm:$0xff] %v592
                %v594 = vld [vmem:[%s588 + $0x10] sm:$0xff]
                %595 = vst [vmem:[%s589 + $0x20] sm:$0xff] %v594
                %v596 = vld [vmem:[%s588 + $0x18] sm:$0xff]
                %597 = vst [vmem:[%s589 + $0x28] sm:$0xff] %v596
              $region69: #{_lambda_.1} parent=63 // loop_footer
                %s587 = sadd.s32 1, %s583
              $region70: #{_lambda_.1} parent=63 // loop_footer_branch
                %582 = sbr.rel target = $region66
              $region71: #{_lambda_.1} parent=63 // loop_exit
                _
            $region64: #{_lambda_.1} parent=59 // pred_fallthru
              _
            // Predicated region
            $region72: #{_lambda_.1} parent=59 // pred_check
              _
            $region73: #{_lambda_.1} parent=59 // pred_check_branch
              %599 = sbr.rel target = $region75
            $region74: #{_lambda_.1} parent=59 // pred_region
              _
            $region75: #{_lambda_.1} parent=59 // pred_fallthru
              _
          $region60: #{_lambda_.1} parent=55 // pred_fallthru
            _
          %600 = vnop
        $region56: #{_lambda_.1} parent=47 // pred_fallthru
          _
      $region48: #{_lambda_.1} parent=5 // pred_fallthru
        _
      %p601 = scmp.le.s32.totalorder 2, %s15
      // Predicated region
      $region76: #{_lambda_.1} parent=5 // pred_check
        %p602 = pneg %p601
      $region77: #{_lambda_.1} parent=5 // pred_check_branch
        %604 = sbr.rel (%p602) target = $region79
      $region78: #{_lambda_.1} parent=5 // pred_region
        %s605 = ssub.s32 %s15, 2
        // Predicated region
        $region80: #{_lambda_.1} parent=78 // pred_check
          %p606 = pneg %p196
        $region81: #{_lambda_.1} parent=78 // pred_check_branch
          %608 = sbr.rel (%p606) target = $region83
        $region82: #{_lambda_.1} parent=78 // pred_region
          %p609 = scmp.lt.s32.totalorder %s21, 1
          %s610 = scalar_select %p609, %s21, 1
          %s611 = smul.addr %s610, 2
          %s612 = smul.addr %s611, 8
          %s613 = scalar_lea.vmem %s7, %s612
        $region83: #{_lambda_.1} parent=78 // pred_fallthru
          _
        // Predicated region
        $region84: #{_lambda_.1} parent=78 // pred_check
          %p614 = pneg %p222
        $region85: #{_lambda_.1} parent=78 // pred_check_branch
          %616 = sbr.rel (%p614) target = $region87
        $region86: #{_lambda_.1} parent=78 // pred_region
          %s617 = sand.u32 %s207, 1
          %s618 = sand.u32 %s207, 1
          %s619 = smul.addr %s618, 32
          %s620 = scalar_lea.vmem [#allocation2], %s619
        $region87: #{_lambda_.1} parent=78 // pred_fallthru
          _
      $region79: #{_lambda_.1} parent=5 // pred_fallthru
        _
    $region6: #{_lambda_.1} parent=1 // loop_footer
      %s19 = sadd.s32 1, %s15
    $region7: #{_lambda_.1} parent=1 // loop_footer_branch
      %14 = sbr.rel target = $region3
    $region8: #{_lambda_.1} parent=1 // loop_exit
      _

</llo_original>
